<compile_context>
chip_gen: v5e
topology: v5e:2x2
jax: 0.10.0
libtpu: 0.0.40
codegen_flags: <defaults>
</compile_context>

<pallas_src>
import jax
import jax.numpy as jnp
from jax.experimental import pallas as pl
from jax.experimental.pallas import tpu as pltpu

# ---- hyper-parameters consistent with the module ----
D_DICT = 16
D_WORD = 8              # divisible by 4 (4 heads in MainUnit)
D_MODEL = 8             # sequence length == d_model (forced by LayerNorm([d_model, d_word]))
D_IMAGE = 4
MAIN_HIDDEN = 32
OUT_HIDDEN = 32
STROKE_MAX = 100
WORD_NUM = 3            # numerically irrelevant (single-key softmax == 1)

DW = D_MODEL * D_WORD                  # 64 (flat activation width)
N_CANVAS = (2 * D_IMAGE) * (2 * D_IMAGE)   # 64
N_IMAGE = D_IMAGE * D_IMAGE                # 16
FF_IN = N_CANVAS + N_IMAGE + DW            # 144
EPS = 1e-5
LANES = 128

# ---- parameter-slab row offsets (all multiples of 8; matrices are full (128,128)
#      blocks so the kernel never slices below tile granularity) ----
R_EMB = 0               # 128 rows: expanded embedding table (pos-encoding folded in)
R_CIW = 128             # 128 rows: canvas/image -> hidden for all 3 units (lane bands)
R_UNIT0 = 256           # start of per-unit blocks
U_WBLK = 0              # 128 rows: fused attention + residual (block-diag)
U_W1X = 128             # 128 rows: x -> hidden, band-placed in lanes u*32:(u+1)*32
U_W2 = 256              # 128 rows: hidden -> 64, band-placed in rows u*32:(u+1)*32
U_BATT = 384            # fused attention bias (tiled)
U_G1 = 392              # LayerNorm1 gamma (flat)
U_BE1 = 400             # LayerNorm1 beta (flat)
U_B2 = 408              # FF second-layer bias (flat)
U_G2 = 416              # LayerNorm2 gamma (flat)
U_BE2 = 424             # LayerNorm2 beta (flat)
U_STRIDE = 432
R_HEAD = R_UNIT0 + 3 * U_STRIDE        # 1552
H_W1 = 0                # 128 rows: head W1^T (lanes 0:32)
H_W2 = 128              # 128 rows: head W2^T (lanes 0:16)
H_B1 = 256              # head b1
H_B2 = 264              # head b2
H_KEEP = 272            # softmax keep-mask (lanes 1:16 == 1)
H_B1ALL = 280           # FF first-layer bias of all 3 units (lane bands)
SLAB_ROWS = R_HEAD + 288               # 1840 rows -> ~0.9 MiB, trivially VMEM-resident


# --------------------------------- kernel -------------------------------------
def _network_kernel(act_ref, p_ref, out_ref):
    f32 = jnp.float32

    def mat(r):      # full (128,128) tile-aligned matrix block
        return p_ref[r:r + 128, :]

    def vec(r):      # single (1,128) parameter row at an 8-row-aligned offset
        return p_ref[r:r + 1, :]

    onehot = act_ref[0:1, :]     # (1,128): one-hot(token m == class t) at lane m*16+t
    ci = act_ref[8:9, :]         # (1,128): [canvas(64) | image(16) | zeros]

    # embedding lookup + AddressEncoding (position column folded into the table)
    x = jnp.dot(onehot, mat(R_EMB), preferred_element_type=f32)       # (1,128), lanes 64+ == 0

    # canvas/image part of all three feed-forwards, hoisted off the serial chain:
    # lanes u*32:(u+1)*32 hold unit u's contribution (b1 included)
    hci = jnp.dot(ci, mat(R_CIW), preferred_element_type=f32) + vec(R_HEAD + H_B1ALL)

    inv_n = 1.0 / DW
    for u in range(3):                       # three MainUnits (unrolled, static offsets)
        base = R_UNIT0 + u * U_STRIDE
        # attention (single-key softmax == 1) + out_proj + residual, fused at pack time
        y = jnp.dot(x, mat(base + U_WBLK), preferred_element_type=f32) + vec(base + U_BATT)
        # LayerNorm over the 64 real elements; E[y^2]-mu^2 keeps the two reduces independent;
        # zero-padded gamma/beta keep lanes 64:128 at exactly 0
        s1 = jnp.sum(y, axis=1, keepdims=True)
        s2 = jnp.sum(y * y, axis=1, keepdims=True)
        mu = s1 * inv_n
        var = jnp.maximum(s2 * inv_n - mu * mu, 0.0)
        ln1 = (y - mu) * jax.lax.rsqrt(var + EPS) * vec(base + U_G1) + vec(base + U_BE1)
        # feed-forward: relu(W1 @ cat(canvas, image, ln1) + b1), relu(W2 @ . + b2)
        h = jnp.maximum(hci + jnp.dot(ln1, mat(base + U_W1X), preferred_element_type=f32), 0.0)
        ff = jnp.maximum(jnp.dot(h, mat(base + U_W2), preferred_element_type=f32)
                         + vec(base + U_B2), 0.0)
        # residual + LayerNorm2
        z = ln1 + ff
        t1 = jnp.sum(z, axis=1, keepdims=True)
        t2 = jnp.sum(z * z, axis=1, keepdims=True)
        mu2 = t1 * inv_n
        var2 = jnp.maximum(t2 * inv_n - mu2 * mu2, 0.0)
        x = (z - mu2) * jax.lax.rsqrt(var2 + EPS) * vec(base + U_G2) + vec(base + U_BE2)

    # output head: Linear-ReLU-Linear-ReLU, softmax fused with the "y[0]=0; y/sum(y)"
    # epilogue as one masked softmax over the lane-dense (1,128) logits
    hh = jnp.maximum(jnp.dot(x, mat(R_HEAD + H_W1), preferred_element_type=f32)
                     + vec(R_HEAD + H_B1), 0.0)
    logits = jnp.maximum(jnp.dot(hh, mat(R_HEAD + H_W2), preferred_element_type=f32)
                         + vec(R_HEAD + H_B2), 0.0)
    keep = vec(R_HEAD + H_KEEP)
    m = jnp.max(logits, axis=1, keepdims=True)   # pads are exactly 0 and real logits >= 0
    e = jnp.exp(logits - m) * keep
    s = jnp.sum(e, axis=1, keepdims=True)
    out_ref[...] = e / s                         # exact divide (parity with the reference)


# ----------------------------- pallas wrapper ----------------------------------
def _vmem():
    return pl.BlockSpec(memory_space=pltpu.MemorySpace.VMEM)


@jax.jit
def network_forward(tokens, image_flat, canvas_flat, word_num, pslab):
    """Forward pass of `Network`.  word_num only builds a key_padding_mask in the
    reference; with sequence length 1 the softmax over the single key is 1, so it is
    numerically a no-op."""
    del word_num
    onehot = (tokens.astype(jnp.int32)[:, None] ==
              jnp.arange(D_DICT, dtype=jnp.int32)[None, :]).astype(jnp.float32)   # (8,16)
    act = jnp.zeros((16, LANES), jnp.float32)
    act = act.at[0, :].set(onehot.reshape(-1))
    act = act.at[8, :N_CANVAS].set(canvas_flat.astype(jnp.float32))
    act = act.at[8, N_CANVAS:N_CANVAS + N_IMAGE].set(image_flat.astype(jnp.float32))
    out = pl.pallas_call(
        _network_kernel,
        out_shape=jax.ShapeDtypeStruct((1, LANES), jnp.float32),
        in_specs=[_vmem(), _vmem()],
        out_specs=_vmem(),
    )(act, pslab)
    return out[0, :D_DICT]


# ----------------------- deterministic parameter packing -----------------------
def _rand(key, shape, scale=0.1):
    return scale * jax.random.normal(key, shape, jnp.float32)


def init_params(key):
    keys = jax.random.split(key, 48)
    it = iter(range(48))
    nk = lambda: keys[next(it)]

    slab = jnp.zeros((SLAB_ROWS, LANES), jnp.float32)

    # embedding (16, d_word-1); positional encoding column folded into the expanded table
    emb = _rand(nk(), (D_DICT, D_WORD - 1))
    for m in range(D_MODEL):
        r0 = R_EMB + m * D_DICT
        slab = slab.at[r0:r0 + D_DICT, m * D_WORD:m * D_WORD + D_WORD - 1].set(emb)
        slab = slab.at[r0:r0 + D_DICT, m * D_WORD + D_WORD - 1].set(m / (STROKE_MAX - 1))

    for u in range(3):
        base = R_UNIT0 + u * U_STRIDE
        Wv = _rand(nk(), (D_WORD, D_WORD)); bv = _rand(nk(), (D_WORD,))
        Wo = _rand(nk(), (D_WORD, D_WORD)); bo = _rand(nk(), (D_WORD,))
        g1 = 1.0 + _rand(nk(), (D_MODEL, D_WORD)); be1 = _rand(nk(), (D_MODEL, D_WORD))
        W1 = _rand(nk(), (MAIN_HIDDEN, FF_IN)); b1 = _rand(nk(), (MAIN_HIDDEN,))
        W2 = _rand(nk(), (DW, MAIN_HIDDEN)); b2 = _rand(nk(), (DW,))
        g2 = 1.0 + _rand(nk(), (D_MODEL, D_WORD)); be2 = _rand(nk(), (D_MODEL, D_WORD))

        # fused attention: y = x @ (Wv^T Wo^T + I) + (bv Wo^T + bo)  (residual folded)
        C = Wv.T @ Wo.T + jnp.eye(D_WORD, dtype=jnp.float32)
        b_comb = bv @ Wo.T + bo
        for m in range(D_MODEL):
            r0 = base + U_WBLK + m * D_WORD
            slab = slab.at[r0:r0 + D_WORD, m * D_WORD:(m + 1) * D_WORD].set(C)
        slab = slab.at[base + U_BATT, :DW].set(jnp.tile(b_comb, D_MODEL))
        slab = slab.at[base + U_G1, :DW].set(g1.reshape(-1))
        slab = slab.at[base + U_BE1, :DW].set(be1.reshape(-1))

        # feed-forward; input = cat(canvas[0:64], image[64:80], x_flat[80:144])
        lo, hi = u * MAIN_HIDDEN, (u + 1) * MAIN_HIDDEN
        slab = slab.at[R_CIW:R_CIW + N_CANVAS, lo:hi].set(W1[:, :N_CANVAS].T)
        slab = slab.at[R_CIW + N_CANVAS:R_CIW + N_CANVAS + N_IMAGE, lo:hi].set(
            W1[:, N_CANVAS:N_CANVAS + N_IMAGE].T)
        slab = slab.at[R_HEAD + H_B1ALL, lo:hi].set(b1)
        slab = slab.at[base + U_W1X:base + U_W1X + DW, lo:hi].set(
            W1[:, N_CANVAS + N_IMAGE:].T)
        slab = slab.at[base + U_W2 + lo:base + U_W2 + hi, :DW].set(W2.T)
        slab = slab.at[base + U_B2, :DW].set(b2)
        slab = slab.at[base + U_G2, :DW].set(g2.reshape(-1))
        slab = slab.at[base + U_BE2, :DW].set(be2.reshape(-1))

    # output head (W2/b2 lane-padded to 128 so the kernel needs no placement matmul)
    W1h = _rand(nk(), (OUT_HIDDEN, DW)); b1h = _rand(nk(), (OUT_HIDDEN,))
    W2h = _rand(nk(), (D_DICT, OUT_HIDDEN)); b2h = _rand(nk(), (D_DICT,))
    slab = slab.at[R_HEAD + H_W1:R_HEAD + H_W1 + DW, :OUT_HIDDEN].set(W1h.T)
    slab = slab.at[R_HEAD + H_W2:R_HEAD + H_W2 + OUT_HIDDEN, :D_DICT].set(W2h.T)
    slab = slab.at[R_HEAD + H_B1, :OUT_HIDDEN].set(b1h)
    slab = slab.at[R_HEAD + H_B2, :D_DICT].set(b2h)
    # baked softmax keep-mask: classes 1..15 ("y[0]=0; y/sum(y)" epilogue)
    slab = slab.at[R_HEAD + H_KEEP, 1:D_DICT].set(1.0)
    return slab


# ----------------------------------- main ---------------------------------------
if __name__ == "__main__":
    key = jax.random.PRNGKey(0)
    kp, kx, ki, kc = jax.random.split(key, 4)
    pslab = init_params(kp)
    tokens = jax.random.randint(kx, (D_MODEL,), 0, D_DICT, dtype=jnp.int32)
    image = jax.random.normal(ki, (N_IMAGE,), jnp.float32)
    canvas = jax.random.normal(kc, (N_CANVAS,), jnp.float32)

    out = network_forward(tokens, image, canvas, WORD_NUM, pslab)
    out = jax.block_until_ready(out)

    assert out.shape == (D_DICT,)
    assert bool(jnp.isfinite(out).all())
    assert float(out[0]) == 0.0
    assert abs(float(jnp.sum(out)) - 1.0) < 1e-5   # exact divide -> sums to 1
    print("KERNEL_OK")
</pallas_src>

<mosaic_0001>
module attributes {stable_mosaic.version = 11 : i64} {
  func.func @_network_kernel(%arg0: memref<16x128xf32, #tpu.memory_space<vmem>>, %arg1: memref<1840x128xf32, #tpu.memory_space<vmem>>, %arg2: memref<1x128xf32, #tpu.memory_space<vmem>>) attributes {dimension_semantics = [], scalar_prefetch = 0 : i64, scratch_operands = 0 : i64, tpu.core_type = #tpu.core_type<tc>} {
    %c0 = arith.constant 0 : index
    %c0_0 = arith.constant 0 : index
    %0 = vector.load %arg0[%c0, %c0_0] : memref<16x128xf32, #tpu.memory_space<vmem>>, vector<1x128xf32>
    %c8 = arith.constant 8 : index
    %c0_1 = arith.constant 0 : index
    %1 = vector.load %arg0[%c8, %c0_1] : memref<16x128xf32, #tpu.memory_space<vmem>>, vector<1x128xf32>
    %c0_2 = arith.constant 0 : index
    %c0_3 = arith.constant 0 : index
    %2 = vector.load %arg1[%c0_2, %c0_3] : memref<1840x128xf32, #tpu.memory_space<vmem>>, vector<128x128xf32>
    %cst = arith.constant dense<0.000000e+00> : vector<1x128xf32>
    %3 = tpu.matmul %0, %2, %cst {dimension_numbers = #tpu.dot_dimension_numbers<[1], [0], [0], [1], [0, 0, 1, 1], [], []>} : vector<1x128xf32>, vector<128x128xf32>, vector<1x128xf32> -> vector<1x128xf32>
    %c128 = arith.constant 128 : index
    %c0_4 = arith.constant 0 : index
    %4 = vector.load %arg1[%c128, %c0_4] : memref<1840x128xf32, #tpu.memory_space<vmem>>, vector<128x128xf32>
    %cst_5 = arith.constant dense<0.000000e+00> : vector<1x128xf32>
    %5 = tpu.matmul %1, %4, %cst_5 {dimension_numbers = #tpu.dot_dimension_numbers<[1], [0], [0], [1], [0, 0, 1, 1], [], []>} : vector<1x128xf32>, vector<128x128xf32>, vector<1x128xf32> -> vector<1x128xf32>
    %c1832 = arith.constant 1832 : index
    %c0_6 = arith.constant 0 : index
    %6 = vector.load %arg1[%c1832, %c0_6] : memref<1840x128xf32, #tpu.memory_space<vmem>>, vector<1x128xf32>
    %7 = arith.addf %5, %6 : vector<1x128xf32>
    %c256 = arith.constant 256 : index
    %c0_7 = arith.constant 0 : index
    %8 = vector.load %arg1[%c256, %c0_7] : memref<1840x128xf32, #tpu.memory_space<vmem>>, vector<128x128xf32>
    %cst_8 = arith.constant dense<0.000000e+00> : vector<1x128xf32>
    %9 = tpu.matmul %3, %8, %cst_8 {dimension_numbers = #tpu.dot_dimension_numbers<[1], [0], [0], [1], [0, 0, 1, 1], [], []>} : vector<1x128xf32>, vector<128x128xf32>, vector<1x128xf32> -> vector<1x128xf32>
    %c640 = arith.constant 640 : index
    %c0_9 = arith.constant 0 : index
    %10 = vector.load %arg1[%c640, %c0_9] : memref<1840x128xf32, #tpu.memory_space<vmem>>, vector<1x128xf32>
    %11 = arith.addf %9, %10 : vector<1x128xf32>
    %cst_10 = arith.constant dense<0.000000e+00> : vector<1xf32>
    %12 = vector.multi_reduction <add>, %11, %cst_10 [1] : vector<1x128xf32> to vector<1xf32>
    %13 = vector.shape_cast %12 : vector<1xf32> to vector<1x1xf32>
    %14 = arith.mulf %11, %11 : vector<1x128xf32>
    %cst_11 = arith.constant dense<0.000000e+00> : vector<1xf32>
    %15 = vector.multi_reduction <add>, %14, %cst_11 [1] : vector<1x128xf32> to vector<1xf32>
    %16 = vector.shape_cast %15 : vector<1xf32> to vector<1x1xf32>
    %cst_12 = arith.constant 1.562500e-02 : f32
    %17 = vector.broadcast %cst_12 : f32 to vector<1x1xf32>
    %18 = arith.mulf %13, %17 : vector<1x1xf32>
    %cst_13 = arith.constant 1.562500e-02 : f32
    %19 = vector.broadcast %cst_13 : f32 to vector<1x1xf32>
    %20 = arith.mulf %16, %19 : vector<1x1xf32>
    %21 = arith.mulf %18, %18 : vector<1x1xf32>
    %22 = arith.subf %20, %21 : vector<1x1xf32>
    %cst_14 = arith.constant 0.000000e+00 : f32
    %23 = vector.broadcast %cst_14 : f32 to vector<1x1xf32>
    %24 = arith.maximumf %22, %23 : vector<1x1xf32>
    %25 = vector.broadcast %18 : vector<1x1xf32> to vector<1x128xf32>
    %26 = arith.subf %11, %25 : vector<1x128xf32>
    %cst_15 = arith.constant 9.99999974E-6 : f32
    %27 = vector.broadcast %cst_15 : f32 to vector<1x1xf32>
    %28 = arith.addf %24, %27 : vector<1x1xf32>
    %29 = math.rsqrt %28 : vector<1x1xf32>
    %30 = vector.broadcast %29 : vector<1x1xf32> to vector<1x128xf32>
    %31 = arith.mulf %26, %30 : vector<1x128xf32>
    %c648 = arith.constant 648 : index
    %c0_16 = arith.constant 0 : index
    %32 = vector.load %arg1[%c648, %c0_16] : memref<1840x128xf32, #tpu.memory_space<vmem>>, vector<1x128xf32>
    %33 = arith.mulf %31, %32 : vector<1x128xf32>
    %c656 = arith.constant 656 : index
    %c0_17 = arith.constant 0 : index
    %34 = vector.load %arg1[%c656, %c0_17] : memref<1840x128xf32, #tpu.memory_space<vmem>>, vector<1x128xf32>
    %35 = arith.addf %33, %34 : vector<1x128xf32>
    %c384 = arith.constant 384 : index
    %c0_18 = arith.constant 0 : index
    %36 = vector.load %arg1[%c384, %c0_18] : memref<1840x128xf32, #tpu.memory_space<vmem>>, vector<128x128xf32>
    %cst_19 = arith.constant dense<0.000000e+00> : vector<1x128xf32>
    %37 = tpu.matmul %35, %36, %cst_19 {dimension_numbers = #tpu.dot_dimension_numbers<[1], [0], [0], [1], [0, 0, 1, 1], [], []>} : vector<1x128xf32>, vector<128x128xf32>, vector<1x128xf32> -> vector<1x128xf32>
    %38 = arith.addf %7, %37 : vector<1x128xf32>
    %cst_20 = arith.constant 0.000000e+00 : f32
    %39 = vector.broadcast %cst_20 : f32 to vector<1x128xf32>
    %40 = arith.maximumf %38, %39 : vector<1x128xf32>
    %c512 = arith.constant 512 : index
    %c0_21 = arith.constant 0 : index
    %41 = vector.load %arg1[%c512, %c0_21] : memref<1840x128xf32, #tpu.memory_space<vmem>>, vector<128x128xf32>
    %cst_22 = arith.constant dense<0.000000e+00> : vector<1x128xf32>
    %42 = tpu.matmul %40, %41, %cst_22 {dimension_numbers = #tpu.dot_dimension_numbers<[1], [0], [0], [1], [0, 0, 1, 1], [], []>} : vector<1x128xf32>, vector<128x128xf32>, vector<1x128xf32> -> vector<1x128xf32>
    %c664 = arith.constant 664 : index
    %c0_23 = arith.constant 0 : index
    %43 = vector.load %arg1[%c664, %c0_23] : memref<1840x128xf32, #tpu.memory_space<vmem>>, vector<1x128xf32>
    %44 = arith.addf %42, %43 : vector<1x128xf32>
    %cst_24 = arith.constant 0.000000e+00 : f32
    %45 = vector.broadcast %cst_24 : f32 to vector<1x128xf32>
    %46 = arith.maximumf %44, %45 : vector<1x128xf32>
    %47 = arith.addf %35, %46 : vector<1x128xf32>
    %cst_25 = arith.constant dense<0.000000e+00> : vector<1xf32>
    %48 = vector.multi_reduction <add>, %47, %cst_25 [1] : vector<1x128xf32> to vector<1xf32>
    %49 = vector.shape_cast %48 : vector<1xf32> to vector<1x1xf32>
    %50 = arith.mulf %47, %47 : vector<1x128xf32>
    %cst_26 = arith.constant dense<0.000000e+00> : vector<1xf32>
    %51 = vector.multi_reduction <add>, %50, %cst_26 [1] : vector<1x128xf32> to vector<1xf32>
    %52 = vector.shape_cast %51 : vector<1xf32> to vector<1x1xf32>
    %cst_27 = arith.constant 1.562500e-02 : f32
    %53 = vector.broadcast %cst_27 : f32 to vector<1x1xf32>
    %54 = arith.mulf %49, %53 : vector<1x1xf32>
    %cst_28 = arith.constant 1.562500e-02 : f32
    %55 = vector.broadcast %cst_28 : f32 to vector<1x1xf32>
    %56 = arith.mulf %52, %55 : vector<1x1xf32>
    %57 = arith.mulf %54, %54 : vector<1x1xf32>
    %58 = arith.subf %56, %57 : vector<1x1xf32>
    %cst_29 = arith.constant 0.000000e+00 : f32
    %59 = vector.broadcast %cst_29 : f32 to vector<1x1xf32>
    %60 = arith.maximumf %58, %59 : vector<1x1xf32>
    %61 = vector.broadcast %54 : vector<1x1xf32> to vector<1x128xf32>
    %62 = arith.subf %47, %61 : vector<1x128xf32>
    %cst_30 = arith.constant 9.99999974E-6 : f32
    %63 = vector.broadcast %cst_30 : f32 to vector<1x1xf32>
    %64 = arith.addf %60, %63 : vector<1x1xf32>
    %65 = math.rsqrt %64 : vector<1x1xf32>
    %66 = vector.broadcast %65 : vector<1x1xf32> to vector<1x128xf32>
    %67 = arith.mulf %62, %66 : vector<1x128xf32>
    %c672 = arith.constant 672 : index
    %c0_31 = arith.constant 0 : index
    %68 = vector.load %arg1[%c672, %c0_31] : memref<1840x128xf32, #tpu.memory_space<vmem>>, vector<1x128xf32>
    %69 = arith.mulf %67, %68 : vector<1x128xf32>
    %c680 = arith.constant 680 : index
    %c0_32 = arith.constant 0 : index
    %70 = vector.load %arg1[%c680, %c0_32] : memref<1840x128xf32, #tpu.memory_space<vmem>>, vector<1x128xf32>
    %71 = arith.addf %69, %70 : vector<1x128xf32>
    %c688 = arith.constant 688 : index
    %c0_33 = arith.constant 0 : index
    %72 = vector.load %arg1[%c688, %c0_33] : memref<1840x128xf32, #tpu.memory_space<vmem>>, vector<128x128xf32>
    %cst_34 = arith.constant dense<0.000000e+00> : vector<1x128xf32>
    %73 = tpu.matmul %71, %72, %cst_34 {dimension_numbers = #tpu.dot_dimension_numbers<[1], [0], [0], [1], [0, 0, 1, 1], [], []>} : vector<1x128xf32>, vector<128x128xf32>, vector<1x128xf32> -> vector<1x128xf32>
    %c1072 = arith.constant 1072 : index
    %c0_35 = arith.constant 0 : index
    %74 = vector.load %arg1[%c1072, %c0_35] : memref<1840x128xf32, #tpu.memory_space<vmem>>, vector<1x128xf32>
    %75 = arith.addf %73, %74 : vector<1x128xf32>
    %cst_36 = arith.constant dense<0.000000e+00> : vector<1xf32>
    %76 = vector.multi_reduction <add>, %75, %cst_36 [1] : vector<1x128xf32> to vector<1xf32>
    %77 = vector.shape_cast %76 : vector<1xf32> to vector<1x1xf32>
    %78 = arith.mulf %75, %75 : vector<1x128xf32>
    %cst_37 = arith.constant dense<0.000000e+00> : vector<1xf32>
    %79 = vector.multi_reduction <add>, %78, %cst_37 [1] : vector<1x128xf32> to vector<1xf32>
    %80 = vector.shape_cast %79 : vector<1xf32> to vector<1x1xf32>
    %cst_38 = arith.constant 1.562500e-02 : f32
    %81 = vector.broadcast %cst_38 : f32 to vector<1x1xf32>
    %82 = arith.mulf %77, %81 : vector<1x1xf32>
    %cst_39 = arith.constant 1.562500e-02 : f32
    %83 = vector.broadcast %cst_39 : f32 to vector<1x1xf32>
    %84 = arith.mulf %80, %83 : vector<1x1xf32>
    %85 = arith.mulf %82, %82 : vector<1x1xf32>
    %86 = arith.subf %84, %85 : vector<1x1xf32>
    %cst_40 = arith.constant 0.000000e+00 : f32
    %87 = vector.broadcast %cst_40 : f32 to vector<1x1xf32>
    %88 = arith.maximumf %86, %87 : vector<1x1xf32>
    %89 = vector.broadcast %82 : vector<1x1xf32> to vector<1x128xf32>
    %90 = arith.subf %75, %89 : vector<1x128xf32>
    %cst_41 = arith.constant 9.99999974E-6 : f32
    %91 = vector.broadcast %cst_41 : f32 to vector<1x1xf32>
    %92 = arith.addf %88, %91 : vector<1x1xf32>
    %93 = math.rsqrt %92 : vector<1x1xf32>
    %94 = vector.broadcast %93 : vector<1x1xf32> to vector<1x128xf32>
    %95 = arith.mulf %90, %94 : vector<1x128xf32>
    %c1080 = arith.constant 1080 : index
    %c0_42 = arith.constant 0 : index
    %96 = vector.load %arg1[%c1080, %c0_42] : memref<1840x128xf32, #tpu.memory_space<vmem>>, vector<1x128xf32>
    %97 = arith.mulf %95, %96 : vector<1x128xf32>
    %c1088 = arith.constant 1088 : index
    %c0_43 = arith.constant 0 : index
    %98 = vector.load %arg1[%c1088, %c0_43] : memref<1840x128xf32, #tpu.memory_space<vmem>>, vector<1x128xf32>
    %99 = arith.addf %97, %98 : vector<1x128xf32>
    %c816 = arith.constant 816 : index
    %c0_44 = arith.constant 0 : index
    %100 = vector.load %arg1[%c816, %c0_44] : memref<1840x128xf32, #tpu.memory_space<vmem>>, vector<128x128xf32>
    %cst_45 = arith.constant dense<0.000000e+00> : vector<1x128xf32>
    %101 = tpu.matmul %99, %100, %cst_45 {dimension_numbers = #tpu.dot_dimension_numbers<[1], [0], [0], [1], [0, 0, 1, 1], [], []>} : vector<1x128xf32>, vector<128x128xf32>, vector<1x128xf32> -> vector<1x128xf32>
    %102 = arith.addf %7, %101 : vector<1x128xf32>
    %cst_46 = arith.constant 0.000000e+00 : f32
    %103 = vector.broadcast %cst_46 : f32 to vector<1x128xf32>
    %104 = arith.maximumf %102, %103 : vector<1x128xf32>
    %c944 = arith.constant 944 : index
    %c0_47 = arith.constant 0 : index
    %105 = vector.load %arg1[%c944, %c0_47] : memref<1840x128xf32, #tpu.memory_space<vmem>>, vector<128x128xf32>
    %cst_48 = arith.constant dense<0.000000e+00> : vector<1x128xf32>
    %106 = tpu.matmul %104, %105, %cst_48 {dimension_numbers = #tpu.dot_dimension_numbers<[1], [0], [0], [1], [0, 0, 1, 1], [], []>} : vector<1x128xf32>, vector<128x128xf32>, vector<1x128xf32> -> vector<1x128xf32>
    %c1096 = arith.constant 1096 : index
    %c0_49 = arith.constant 0 : index
    %107 = vector.load %arg1[%c1096, %c0_49] : memref<1840x128xf32, #tpu.memory_space<vmem>>, vector<1x128xf32>
    %108 = arith.addf %106, %107 : vector<1x128xf32>
    %cst_50 = arith.constant 0.000000e+00 : f32
    %109 = vector.broadcast %cst_50 : f32 to vector<1x128xf32>
    %110 = arith.maximumf %108, %109 : vector<1x128xf32>
    %111 = arith.addf %99, %110 : vector<1x128xf32>
    %cst_51 = arith.constant dense<0.000000e+00> : vector<1xf32>
    %112 = vector.multi_reduction <add>, %111, %cst_51 [1] : vector<1x128xf32> to vector<1xf32>
    %113 = vector.shape_cast %112 : vector<1xf32> to vector<1x1xf32>
    %114 = arith.mulf %111, %111 : vector<1x128xf32>
    %cst_52 = arith.constant dense<0.000000e+00> : vector<1xf32>
    %115 = vector.multi_reduction <add>, %114, %cst_52 [1] : vector<1x128xf32> to vector<1xf32>
    %116 = vector.shape_cast %115 : vector<1xf32> to vector<1x1xf32>
    %cst_53 = arith.constant 1.562500e-02 : f32
    %117 = vector.broadcast %cst_53 : f32 to vector<1x1xf32>
    %118 = arith.mulf %113, %117 : vector<1x1xf32>
    %cst_54 = arith.constant 1.562500e-02 : f32
    %119 = vector.broadcast %cst_54 : f32 to vector<1x1xf32>
    %120 = arith.mulf %116, %119 : vector<1x1xf32>
    %121 = arith.mulf %118, %118 : vector<1x1xf32>
    %122 = arith.subf %120, %121 : vector<1x1xf32>
    %cst_55 = arith.constant 0.000000e+00 : f32
    %123 = vector.broadcast %cst_55 : f32 to vector<1x1xf32>
    %124 = arith.maximumf %122, %123 : vector<1x1xf32>
    %125 = vector.broadcast %118 : vector<1x1xf32> to vector<1x128xf32>
    %126 = arith.subf %111, %125 : vector<1x128xf32>
    %cst_56 = arith.constant 9.99999974E-6 : f32
    %127 = vector.broadcast %cst_56 : f32 to vector<1x1xf32>
    %128 = arith.addf %124, %127 : vector<1x1xf32>
    %129 = math.rsqrt %128 : vector<1x1xf32>
    %130 = vector.broadcast %129 : vector<1x1xf32> to vector<1x128xf32>
    %131 = arith.mulf %126, %130 : vector<1x128xf32>
    %c1104 = arith.constant 1104 : index
    %c0_57 = arith.constant 0 : index
    %132 = vector.load %arg1[%c1104, %c0_57] : memref<1840x128xf32, #tpu.memory_space<vmem>>, vector<1x128xf32>
    %133 = arith.mulf %131, %132 : vector<1x128xf32>
    %c1112 = arith.constant 1112 : index
    %c0_58 = arith.constant 0 : index
    %134 = vector.load %arg1[%c1112, %c0_58] : memref<1840x128xf32, #tpu.memory_space<vmem>>, vector<1x128xf32>
    %135 = arith.addf %133, %134 : vector<1x128xf32>
    %c1120 = arith.constant 1120 : index
    %c0_59 = arith.constant 0 : index
    %136 = vector.load %arg1[%c1120, %c0_59] : memref<1840x128xf32, #tpu.memory_space<vmem>>, vector<128x128xf32>
    %cst_60 = arith.constant dense<0.000000e+00> : vector<1x128xf32>
    %137 = tpu.matmul %135, %136, %cst_60 {dimension_numbers = #tpu.dot_dimension_numbers<[1], [0], [0], [1], [0, 0, 1, 1], [], []>} : vector<1x128xf32>, vector<128x128xf32>, vector<1x128xf32> -> vector<1x128xf32>
    %c1504 = arith.constant 1504 : index
    %c0_61 = arith.constant 0 : index
    %138 = vector.load %arg1[%c1504, %c0_61] : memref<1840x128xf32, #tpu.memory_space<vmem>>, vector<1x128xf32>
    %139 = arith.addf %137, %138 : vector<1x128xf32>
    %cst_62 = arith.constant dense<0.000000e+00> : vector<1xf32>
    %140 = vector.multi_reduction <add>, %139, %cst_62 [1] : vector<1x128xf32> to vector<1xf32>
    %141 = vector.shape_cast %140 : vector<1xf32> to vector<1x1xf32>
    %142 = arith.mulf %139, %139 : vector<1x128xf32>
    %cst_63 = arith.constant dense<0.000000e+00> : vector<1xf32>
    %143 = vector.multi_reduction <add>, %142, %cst_63 [1] : vector<1x128xf32> to vector<1xf32>
    %144 = vector.shape_cast %143 : vector<1xf32> to vector<1x1xf32>
    %cst_64 = arith.constant 1.562500e-02 : f32
    %145 = vector.broadcast %cst_64 : f32 to vector<1x1xf32>
    %146 = arith.mulf %141, %145 : vector<1x1xf32>
    %cst_65 = arith.constant 1.562500e-02 : f32
    %147 = vector.broadcast %cst_65 : f32 to vector<1x1xf32>
    %148 = arith.mulf %144, %147 : vector<1x1xf32>
    %149 = arith.mulf %146, %146 : vector<1x1xf32>
    %150 = arith.subf %148, %149 : vector<1x1xf32>
    %cst_66 = arith.constant 0.000000e+00 : f32
    %151 = vector.broadcast %cst_66 : f32 to vector<1x1xf32>
    %152 = arith.maximumf %150, %151 : vector<1x1xf32>
    %153 = vector.broadcast %146 : vector<1x1xf32> to vector<1x128xf32>
    %154 = arith.subf %139, %153 : vector<1x128xf32>
    %cst_67 = arith.constant 9.99999974E-6 : f32
    %155 = vector.broadcast %cst_67 : f32 to vector<1x1xf32>
    %156 = arith.addf %152, %155 : vector<1x1xf32>
    %157 = math.rsqrt %156 : vector<1x1xf32>
    %158 = vector.broadcast %157 : vector<1x1xf32> to vector<1x128xf32>
    %159 = arith.mulf %154, %158 : vector<1x128xf32>
    %c1512 = arith.constant 1512 : index
    %c0_68 = arith.constant 0 : index
    %160 = vector.load %arg1[%c1512, %c0_68] : memref<1840x128xf32, #tpu.memory_space<vmem>>, vector<1x128xf32>
    %161 = arith.mulf %159, %160 : vector<1x128xf32>
    %c1520 = arith.constant 1520 : index
    %c0_69 = arith.constant 0 : index
    %162 = vector.load %arg1[%c1520, %c0_69] : memref<1840x128xf32, #tpu.memory_space<vmem>>, vector<1x128xf32>
    %163 = arith.addf %161, %162 : vector<1x128xf32>
    %c1248 = arith.constant 1248 : index
    %c0_70 = arith.constant 0 : index
    %164 = vector.load %arg1[%c1248, %c0_70] : memref<1840x128xf32, #tpu.memory_space<vmem>>, vector<128x128xf32>
    %cst_71 = arith.constant dense<0.000000e+00> : vector<1x128xf32>
    %165 = tpu.matmul %163, %164, %cst_71 {dimension_numbers = #tpu.dot_dimension_numbers<[1], [0], [0], [1], [0, 0, 1, 1], [], []>} : vector<1x128xf32>, vector<128x128xf32>, vector<1x128xf32> -> vector<1x128xf32>
    %166 = arith.addf %7, %165 : vector<1x128xf32>
    %cst_72 = arith.constant 0.000000e+00 : f32
    %167 = vector.broadcast %cst_72 : f32 to vector<1x128xf32>
    %168 = arith.maximumf %166, %167 : vector<1x128xf32>
    %c1376 = arith.constant 1376 : index
    %c0_73 = arith.constant 0 : index
    %169 = vector.load %arg1[%c1376, %c0_73] : memref<1840x128xf32, #tpu.memory_space<vmem>>, vector<128x128xf32>
    %cst_74 = arith.constant dense<0.000000e+00> : vector<1x128xf32>
    %170 = tpu.matmul %168, %169, %cst_74 {dimension_numbers = #tpu.dot_dimension_numbers<[1], [0], [0], [1], [0, 0, 1, 1], [], []>} : vector<1x128xf32>, vector<128x128xf32>, vector<1x128xf32> -> vector<1x128xf32>
    %c1528 = arith.constant 1528 : index
    %c0_75 = arith.constant 0 : index
    %171 = vector.load %arg1[%c1528, %c0_75] : memref<1840x128xf32, #tpu.memory_space<vmem>>, vector<1x128xf32>
    %172 = arith.addf %170, %171 : vector<1x128xf32>
    %cst_76 = arith.constant 0.000000e+00 : f32
    %173 = vector.broadcast %cst_76 : f32 to vector<1x128xf32>
    %174 = arith.maximumf %172, %173 : vector<1x128xf32>
    %175 = arith.addf %163, %174 : vector<1x128xf32>
    %cst_77 = arith.constant dense<0.000000e+00> : vector<1xf32>
    %176 = vector.multi_reduction <add>, %175, %cst_77 [1] : vector<1x128xf32> to vector<1xf32>
    %177 = vector.shape_cast %176 : vector<1xf32> to vector<1x1xf32>
    %178 = arith.mulf %175, %175 : vector<1x128xf32>
    %cst_78 = arith.constant dense<0.000000e+00> : vector<1xf32>
    %179 = vector.multi_reduction <add>, %178, %cst_78 [1] : vector<1x128xf32> to vector<1xf32>
    %180 = vector.shape_cast %179 : vector<1xf32> to vector<1x1xf32>
    %cst_79 = arith.constant 1.562500e-02 : f32
    %181 = vector.broadcast %cst_79 : f32 to vector<1x1xf32>
    %182 = arith.mulf %177, %181 : vector<1x1xf32>
    %cst_80 = arith.constant 1.562500e-02 : f32
    %183 = vector.broadcast %cst_80 : f32 to vector<1x1xf32>
    %184 = arith.mulf %180, %183 : vector<1x1xf32>
    %185 = arith.mulf %182, %182 : vector<1x1xf32>
    %186 = arith.subf %184, %185 : vector<1x1xf32>
    %cst_81 = arith.constant 0.000000e+00 : f32
    %187 = vector.broadcast %cst_81 : f32 to vector<1x1xf32>
    %188 = arith.maximumf %186, %187 : vector<1x1xf32>
    %189 = vector.broadcast %182 : vector<1x1xf32> to vector<1x128xf32>
    %190 = arith.subf %175, %189 : vector<1x128xf32>
    %cst_82 = arith.constant 9.99999974E-6 : f32
    %191 = vector.broadcast %cst_82 : f32 to vector<1x1xf32>
    %192 = arith.addf %188, %191 : vector<1x1xf32>
    %193 = math.rsqrt %192 : vector<1x1xf32>
    %194 = vector.broadcast %193 : vector<1x1xf32> to vector<1x128xf32>
    %195 = arith.mulf %190, %194 : vector<1x128xf32>
    %c1536 = arith.constant 1536 : index
    %c0_83 = arith.constant 0 : index
    %196 = vector.load %arg1[%c1536, %c0_83] : memref<1840x128xf32, #tpu.memory_space<vmem>>, vector<1x128xf32>
    %197 = arith.mulf %195, %196 : vector<1x128xf32>
    %c1544 = arith.constant 1544 : index
    %c0_84 = arith.constant 0 : index
    %198 = vector.load %arg1[%c1544, %c0_84] : memref<1840x128xf32, #tpu.memory_space<vmem>>, vector<1x128xf32>
    %199 = arith.addf %197, %198 : vector<1x128xf32>
    %c1552 = arith.constant 1552 : index
    %c0_85 = arith.constant 0 : index
    %200 = vector.load %arg1[%c1552, %c0_85] : memref<1840x128xf32, #tpu.memory_space<vmem>>, vector<128x128xf32>
    %cst_86 = arith.constant dense<0.000000e+00> : vector<1x128xf32>
    %201 = tpu.matmul %199, %200, %cst_86 {dimension_numbers = #tpu.dot_dimension_numbers<[1], [0], [0], [1], [0, 0, 1, 1], [], []>} : vector<1x128xf32>, vector<128x128xf32>, vector<1x128xf32> -> vector<1x128xf32>
    %c1808 = arith.constant 1808 : index
    %c0_87 = arith.constant 0 : index
    %202 = vector.load %arg1[%c1808, %c0_87] : memref<1840x128xf32, #tpu.memory_space<vmem>>, vector<1x128xf32>
    %203 = arith.addf %201, %202 : vector<1x128xf32>
    %cst_88 = arith.constant 0.000000e+00 : f32
    %204 = vector.broadcast %cst_88 : f32 to vector<1x128xf32>
    %205 = arith.maximumf %203, %204 : vector<1x128xf32>
    %c1680 = arith.constant 1680 : index
    %c0_89 = arith.constant 0 : index
    %206 = vector.load %arg1[%c1680, %c0_89] : memref<1840x128xf32, #tpu.memory_space<vmem>>, vector<128x128xf32>
    %cst_90 = arith.constant dense<0.000000e+00> : vector<1x128xf32>
    %207 = tpu.matmul %205, %206, %cst_90 {dimension_numbers = #tpu.dot_dimension_numbers<[1], [0], [0], [1], [0, 0, 1, 1], [], []>} : vector<1x128xf32>, vector<128x128xf32>, vector<1x128xf32> -> vector<1x128xf32>
    %c1816 = arith.constant 1816 : index
    %c0_91 = arith.constant 0 : index
    %208 = vector.load %arg1[%c1816, %c0_91] : memref<1840x128xf32, #tpu.memory_space<vmem>>, vector<1x128xf32>
    %209 = arith.addf %207, %208 : vector<1x128xf32>
    %cst_92 = arith.constant 0.000000e+00 : f32
    %210 = vector.broadcast %cst_92 : f32 to vector<1x128xf32>
    %211 = arith.maximumf %209, %210 : vector<1x128xf32>
    %c1824 = arith.constant 1824 : index
    %c0_93 = arith.constant 0 : index
    %212 = vector.load %arg1[%c1824, %c0_93] : memref<1840x128xf32, #tpu.memory_space<vmem>>, vector<1x128xf32>
    %cst_94 = arith.constant dense<0xFF800000> : vector<1xf32>
    %213 = vector.multi_reduction <maximumf>, %211, %cst_94 [1] : vector<1x128xf32> to vector<1xf32>
    %214 = vector.shape_cast %213 : vector<1xf32> to vector<1x1xf32>
    %215 = vector.broadcast %214 : vector<1x1xf32> to vector<1x128xf32>
    %216 = arith.subf %211, %215 : vector<1x128xf32>
    %217 = math.exp %216 : vector<1x128xf32>
    %218 = arith.mulf %217, %212 : vector<1x128xf32>
    %cst_95 = arith.constant dense<0.000000e+00> : vector<1xf32>
    %219 = vector.multi_reduction <add>, %218, %cst_95 [1] : vector<1x128xf32> to vector<1xf32>
    %220 = vector.shape_cast %219 : vector<1xf32> to vector<1x1xf32>
    %221 = vector.broadcast %220 : vector<1x1xf32> to vector<1x128xf32>
    %222 = arith.divf %218, %221 : vector<1x128xf32>
    %c0_96 = arith.constant 0 : index
    %c0_97 = arith.constant 0 : index
    %223 = vector.load %arg2[%c0_96, %c0_97] : memref<1x128xf32, #tpu.memory_space<vmem>>, vector<1x128xf32>
    tpu.vector_store %arg2[%c0_96, %c0_97], %222 {strides = array<i32>} : memref<1x128xf32, #tpu.memory_space<vmem>>, vector<1x128xf32>,
    return
  }
}

</mosaic_0001>

<llo_original>
// kernel: network_forward.1
$region0: #{network_forward.1}
  #allocation0 [shape = 'u32[]', space=smem, size = 0x4, offset = 0x4, fixed_abs, tag = 'smem constant byte address 0x4 - core index']
  #allocation1 [shape = 'u32[72,128]{1,0:T(1,128)}', space=vmem, size = 0x9000, scoped, tag = 'internal scratch']
  %s0 = inlined_call_operand.vmem [shape: f32[16,128], index: 0, kind: input, shape index: {}]
  %s1 = inlined_call_operand.hbm [shape: f32[1840,128], index: 1, kind: input, shape index: {}]
  %s2 = inlined_call_operand.vmem [shape: f32[1,128], index: 2, kind: output, shape index: {}]
  %s3 = sld [smem:[#allocation0]]
  $region22: #{network_forward.1} parent=0
    _
  %s5 = ssub.s32 1, %s3
  %s6 = scalar_select 0, %s5, %s3
  $region1: #{network_forward.1} parent=0
    #allocation2 [shape = 'u8[942080]{0}', space=vmem, size = 0xe6000, scoped, tag = 'input window, operand 1, single buffered']
    #allocation3 [shape = 's32[1]{0}', space=sflag, size = 0x4, scoped, tag = 'scoped memory for network_forward.1']
    %7 = vsyncpa [#allocation3], 0
    // Predicated region
    $region2: #{network_forward.1} parent=1 // pred_check
      _
    $region3: #{network_forward.1} parent=1 // pred_check_branch
      %9 = sbr.rel (0) target = $region5
    $region4: #{network_forward.1} parent=1 // pred_region
      _
    $region5: #{network_forward.1} parent=1 // pred_fallthru
      _
    // Predicated region
    $region6: #{network_forward.1} parent=1 // pred_check
      _
    $region7: #{network_forward.1} parent=1 // pred_check_branch
      %11 = sbr.rel (0) target = $region9
    $region8: #{network_forward.1} parent=1 // pred_region
      %13 = vsyncadd [#allocation3], 0
      %s14 = sshll.u32 %s1, 4
      %s15 = int_to_ptr.hbm [resolvable:$true] %s14
      %s16 = sshll.u32 [#allocation2], 4
      %s17 = int_to_ptr.vmem [resolvable:$true] %s16
      %22 = dma.hbm_to_vmem [thread:$0]  %s15, 29440, %s17, [#allocation3], 128, 128, 8
    $region9: #{network_forward.1} parent=1 // pred_fallthru
      _
    // Predicated region
    $region10: #{network_forward.1} parent=1 // pred_check
      _
    $region11: #{network_forward.1} parent=1 // pred_check_branch
      %24 = sbr.rel (0) target = $region13
    $region12: #{network_forward.1} parent=1 // pred_region
      %26 = dma.done [#allocation3], 29440
    $region13: #{network_forward.1} parent=1 // pred_fallthru
      _
    %v27 = vld [vmem:[%s0] sm:$0x1]
    %v28 = vld [vmem:[%s0 + $0x8] sm:$0x1]
    %v29 = vld [vmem:[#allocation2] sm:$0xff]
    %v30 = vld [vmem:[#allocation2 + $0x8] sm:$0xff]
    %v31 = vld [vmem:[#allocation2 + $0x10] sm:$0xff]
    %v32 = vld [vmem:[#allocation2 + $0x18] sm:$0xff]
    %v33 = vld [vmem:[#allocation2 + $0x20] sm:$0xff]
    %v34 = vld [vmem:[#allocation2 + $0x28] sm:$0xff]
    %v35 = vld [vmem:[#allocation2 + $0x30] sm:$0xff]
    %v36 = vld [vmem:[#allocation2 + $0x38] sm:$0xff]
    %v37 = vld [vmem:[#allocation2 + $0x40] sm:$0xff]
    %v38 = vld [vmem:[#allocation2 + $0x48] sm:$0xff]
    %v39 = vld [vmem:[#allocation2 + $0x50] sm:$0xff]
    %v40 = vld [vmem:[#allocation2 + $0x58] sm:$0xff]
    %v41 = vld [vmem:[#allocation2 + $0x60] sm:$0xff]
    %v42 = vld [vmem:[#allocation2 + $0x68] sm:$0xff]
    %v43 = vld [vmem:[#allocation2 + $0x70] sm:$0xff]
    %v44 = vld [vmem:[#allocation2 + $0x78] sm:$0xff]
    %45 = vmatpush.msra.mxu0 %v44
    %46 = vmatpush.msra.mxu0 %v43
    %47 = vmatpush.msra.mxu0 %v42
    %48 = vmatpush.msra.mxu0 %v41
    %49 = vmatpush.msra.mxu0 %v40
    %50 = vmatpush.msra.mxu0 %v39
    %51 = vmatpush.msra.mxu0 %v38
    %52 = vmatpush.msra.mxu0 %v37
    %53 = vmatpush.msra.mxu0 %v36
    %54 = vmatpush.msra.mxu0 %v35
    %55 = vmatpush.msra.mxu0 %v34
    %56 = vmatpush.msra.mxu0 %v33
    %57 = vmatpush.msra.mxu0 %v32
    %58 = vmatpush.msra.mxu0 %v31
    %59 = vmatpush.msra.mxu0 %v30
    %60 = vmatpush.msra.mxu0 %v29
    %61 = vmatmul.f32.gmra.mxu0 %v27
    %v62 = vpop.f32.mrf.mxu0
    %v63 = vadd.f32 0.0, %v62
    %64 = vdwg.mxu0
    %v65 = vld [vmem:[#allocation2 + $0x80] sm:$0xff]
    %v66 = vld [vmem:[#allocation2 + $0x88] sm:$0xff]
    %v67 = vld [vmem:[#allocation2 + $0x90] sm:$0xff]
    %v68 = vld [vmem:[#allocation2 + $0x98] sm:$0xff]
    %v69 = vld [vmem:[#allocation2 + $0xa0] sm:$0xff]
    %v70 = vld [vmem:[#allocation2 + $0xa8] sm:$0xff]
    %v71 = vld [vmem:[#allocation2 + $0xb0] sm:$0xff]
    %v72 = vld [vmem:[#allocation2 + $0xb8] sm:$0xff]
    %v73 = vld [vmem:[#allocation2 + $0xc0] sm:$0xff]
    %v74 = vld [vmem:[#allocation2 + $0xc8] sm:$0xff]
    %v75 = vld [vmem:[#allocation2 + $0xd0] sm:$0xff]
    %v76 = vld [vmem:[#allocation2 + $0xd8] sm:$0xff]
    %v77 = vld [vmem:[#allocation2 + $0xe0] sm:$0xff]
    %v78 = vld [vmem:[#allocation2 + $0xe8] sm:$0xff]
    %v79 = vld [vmem:[#allocation2 + $0xf0] sm:$0xff]
    %v80 = vld [vmem:[#allocation2 + $0xf8] sm:$0xff]
    %v81 = vld [vmem:[#allocation2 + $0x728] sm:$0x1]
    %82 = vmatpush.msra.mxu0 %v80
    %83 = vmatpush.msra.mxu0 %v79
    %84 = vmatpush.msra.mxu0 %v78
    %85 = vmatpush.msra.mxu0 %v77
    %86 = vmatpush.msra.mxu0 %v76
    %87 = vmatpush.msra.mxu0 %v75
    %88 = vmatpush.msra.mxu0 %v74
    %89 = vmatpush.msra.mxu0 %v73
    %90 = vmatpush.msra.mxu0 %v72
    %91 = vmatpush.msra.mxu0 %v71
    %92 = vmatpush.msra.mxu0 %v70
    %93 = vmatpush.msra.mxu0 %v69
    %94 = vmatpush.msra.mxu0 %v68
    %95 = vmatpush.msra.mxu0 %v67
    %96 = vmatpush.msra.mxu0 %v66
    %97 = vmatpush.msra.mxu0 %v65
    %98 = vmatmul.f32.gmra.mxu0 %v28
    %v99 = vpop.f32.mrf.mxu0
    %v100 = vadd.f32 %v81, %v99
    %101 = vdwg.mxu0
    %v102 = vld [vmem:[#allocation2 + $0x100] sm:$0xff]
    %v103 = vld [vmem:[#allocation2 + $0x108] sm:$0xff]
    %v104 = vld [vmem:[#allocation2 + $0x110] sm:$0xff]
    %v105 = vld [vmem:[#allocation2 + $0x118] sm:$0xff]
    %v106 = vld [vmem:[#allocation2 + $0x120] sm:$0xff]
    %v107 = vld [vmem:[#allocation2 + $0x128] sm:$0xff]
    %v108 = vld [vmem:[#allocation2 + $0x130] sm:$0xff]
    %v109 = vld [vmem:[#allocation2 + $0x138] sm:$0xff]
    %v110 = vld [vmem:[#allocation2 + $0x140] sm:$0xff]
    %v111 = vld [vmem:[#allocation2 + $0x148] sm:$0xff]
    %v112 = vld [vmem:[#allocation2 + $0x150] sm:$0xff]
    %v113 = vld [vmem:[#allocation2 + $0x158] sm:$0xff]
    %v114 = vld [vmem:[#allocation2 + $0x160] sm:$0xff]
    %v115 = vld [vmem:[#allocation2 + $0x168] sm:$0xff]
    %v116 = vld [vmem:[#allocation2 + $0x170] sm:$0xff]
    %v117 = vld [vmem:[#allocation2 + $0x178] sm:$0xff]
    %v118 = vld [vmem:[#allocation2 + $0x280] sm:$0x1]
    %119 = vmatpush.msra.mxu0 %v117
    %120 = vmatpush.msra.mxu0 %v116
    %121 = vmatpush.msra.mxu0 %v115
    %122 = vmatpush.msra.mxu0 %v114
    %123 = vmatpush.msra.mxu0 %v113
    %124 = vmatpush.msra.mxu0 %v112
    %125 = vmatpush.msra.mxu0 %v111
    %126 = vmatpush.msra.mxu0 %v110
    %127 = vmatpush.msra.mxu0 %v109
    %128 = vmatpush.msra.mxu0 %v108
    %129 = vmatpush.msra.mxu0 %v107
    %130 = vmatpush.msra.mxu0 %v106
    %131 = vmatpush.msra.mxu0 %v105
    %132 = vmatpush.msra.mxu0 %v104
    %133 = vmatpush.msra.mxu0 %v103
    %134 = vmatpush.msra.mxu0 %v102
    %135 = vmatmul.f32.gmra.mxu0 %v63
    %v136 = vpop.f32.mrf.mxu0
    %v137 = vadd.f32 %v118, %v136
    %138 = vdwg.mxu0
    %vm139 = vcmask 1040384
    %v140 = vsel %vm139, %v137, 0.0
    %141 = vadd.xlane.f32.xlu0 %v140
    %v142 = vpop.xlane.xlu0 %141
    %v143 = vmul.f32 %v137, %v137
    %v144 = vsel %vm139, %v143, 0.0
    %145 = vadd.xlane.f32.xlu0 %v144
    %v146 = vpop.xlane.xlu0 %145
    %v147 = vmul.f32 %v142, 0.015625
    %v148 = vmul.f32 %v146, 0.015625
    %v149 = vmul.f32 %v147, %v147
    %v150 = vsub.f32 %v148, %v149
    %v151 = vmax.f32 %v150, 0.0
    %v152 = vsub.f32 %v137, %v147
    %v153 = vadd.f32 %v151, 1e-05
    %v154 = vrsqrt.pop %v153
    %v155 = vmul.f32 %v154, %v153
    %v156 = vmul.f32 %v155, %v154
    %v157 = vmul.f32 0.5, %v156
    %v158 = vsub.f32 1.5, %v157
    %v159 = vmul.f32 %v154, %v158
    %vm160 = vweird.f32 %v153
    %vm161 = vweird.f32 %v154
    %vm162 = vmor %vm160, %vm161
    %v163 = vsel %vm162, %v154, %v159
    %v164 = vmul.f32 %v152, %v163
    %v165 = vld [vmem:[#allocation2 + $0x288] sm:$0x1]
    %v166 = vmul.f32 %v164, %v165
    %v167 = vld [vmem:[#allocation2 + $0x290] sm:$0x1]
    %v168 = vadd.f32 %v166, %v167
    %v169 = vld [vmem:[#allocation2 + $0x180] sm:$0xff]
    %v170 = vld [vmem:[#allocation2 + $0x188] sm:$0xff]
    %v171 = vld [vmem:[#allocation2 + $0x190] sm:$0xff]
    %v172 = vld [vmem:[#allocation2 + $0x198] sm:$0xff]
    %v173 = vld [vmem:[#allocation2 + $0x1a0] sm:$0xff]
    %v174 = vld [vmem:[#allocation2 + $0x1a8] sm:$0xff]
    %v175 = vld [vmem:[#allocation2 + $0x1b0] sm:$0xff]
    %v176 = vld [vmem:[#allocation2 + $0x1b8] sm:$0xff]
    %v177 = vld [vmem:[#allocation2 + $0x1c0] sm:$0xff]
    %v178 = vld [vmem:[#allocation2 + $0x1c8] sm:$0xff]
    %v179 = vld [vmem:[#allocation2 + $0x1d0] sm:$0xff]
    %v180 = vld [vmem:[#allocation2 + $0x1d8] sm:$0xff]
    %v181 = vld [vmem:[#allocation2 + $0x1e0] sm:$0xff]
    %v182 = vld [vmem:[#allocation2 + $0x1e8] sm:$0xff]
    %v183 = vld [vmem:[#allocation2 + $0x1f0] sm:$0xff]
    %v184 = vld [vmem:[#allocation2 + $0x1f8] sm:$0xff]
    %185 = vmatpush.msra.mxu0 %v184
    %186 = vmatpush.msra.mxu0 %v183
    %187 = vmatpush.msra.mxu0 %v182
    %188 = vmatpush.msra.mxu0 %v181
    %189 = vmatpush.msra.mxu0 %v180
    %190 = vmatpush.msra.mxu0 %v179
    %191 = vmatpush.msra.mxu0 %v178
    %192 = vmatpush.msra.mxu0 %v177
    %193 = vmatpush.msra.mxu0 %v176
    %194 = vmatpush.msra.mxu0 %v175
    %195 = vmatpush.msra.mxu0 %v174
    %196 = vmatpush.msra.mxu0 %v173
    %197 = vmatpush.msra.mxu0 %v172
    %198 = vmatpush.msra.mxu0 %v171
    %199 = vmatpush.msra.mxu0 %v170
    %200 = vmatpush.msra.mxu0 %v169
    %201 = vmatmul.f32.gmra.mxu0 %v168
    %v202 = vpop.f32.mrf.mxu0
    %v203 = vadd.f32 0.0, %v202
    %204 = vdwg.mxu0
    %v205 = vadd.f32 %v100, %v203
    %v206 = vmax.f32 %v205, 0.0
    %v207 = vld [vmem:[#allocation2 + $0x200] sm:$0xff]
    %v208 = vld [vmem:[#allocation2 + $0x208] sm:$0xff]
    %v209 = vld [vmem:[#allocation2 + $0x210] sm:$0xff]
    %v210 = vld [vmem:[#allocation2 + $0x218] sm:$0xff]
    %v211 = vld [vmem:[#allocation2 + $0x220] sm:$0xff]
    %v212 = vld [vmem:[#allocation2 + $0x228] sm:$0xff]
    %v213 = vld [vmem:[#allocation2 + $0x230] sm:$0xff]
    %v214 = vld [vmem:[#allocation2 + $0x238] sm:$0xff]
    %v215 = vld [vmem:[#allocation2 + $0x240] sm:$0xff]
    %v216 = vld [vmem:[#allocation2 + $0x248] sm:$0xff]
    %v217 = vld [vmem:[#allocation2 + $0x250] sm:$0xff]
    %v218 = vld [vmem:[#allocation2 + $0x258] sm:$0xff]
    %v219 = vld [vmem:[#allocation2 + $0x260] sm:$0xff]
    %v220 = vld [vmem:[#allocation2 + $0x268] sm:$0xff]
    %v221 = vld [vmem:[#allocation2 + $0x270] sm:$0xff]
    %v222 = vld [vmem:[#allocation2 + $0x278] sm:$0xff]
    %v223 = vld [vmem:[#allocation2 + $0x298] sm:$0x1]
    %224 = vmatpush.msra.mxu0 %v222
    %225 = vmatpush.msra.mxu0 %v221
    %226 = vmatpush.msra.mxu0 %v220
    %227 = vmatpush.msra.mxu0 %v219
    %228 = vmatpush.msra.mxu0 %v218
    %229 = vmatpush.msra.mxu0 %v217
    %230 = vmatpush.msra.mxu0 %v216
    %231 = vmatpush.msra.mxu0 %v215
    %232 = vmatpush.msra.mxu0 %v214
    %233 = vmatpush.msra.mxu0 %v213
    %234 = vmatpush.msra.mxu0 %v212
    %235 = vmatpush.msra.mxu0 %v211
    %236 = vmatpush.msra.mxu0 %v210
    %237 = vmatpush.msra.mxu0 %v209
    %238 = vmatpush.msra.mxu0 %v208
    %239 = vmatpush.msra.mxu0 %v207
    %240 = vmatmul.f32.gmra.mxu0 %v206
    %v241 = vpop.f32.mrf.mxu0
    %v242 = vadd.f32 %v223, %v241
    %243 = vdwg.mxu0
    %v244 = vmax.f32 %v242, 0.0
    %v245 = vadd.f32 %v168, %v244
    %v246 = vsel %vm139, %v245, 0.0
    %247 = vadd.xlane.f32.xlu0 %v246
    %v248 = vpop.xlane.xlu0 %247
    %v249 = vmul.f32 %v245, %v245
    %v250 = vsel %vm139, %v249, 0.0
    %251 = vadd.xlane.f32.xlu0 %v250
    %v252 = vpop.xlane.xlu0 %251
    %v253 = vmul.f32 %v248, 0.015625
    %v254 = vmul.f32 %v252, 0.015625
    %v255 = vmul.f32 %v253, %v253
    %v256 = vsub.f32 %v254, %v255
    %v257 = vmax.f32 %v256, 0.0
    %v258 = vsub.f32 %v245, %v253
    %v259 = vadd.f32 %v257, 1e-05
    %v260 = vrsqrt.pop %v259
    %v261 = vmul.f32 %v260, %v259
    %v262 = vmul.f32 %v261, %v260
    %v263 = vmul.f32 0.5, %v262
    %v264 = vsub.f32 1.5, %v263
    %v265 = vmul.f32 %v260, %v264
    %vm266 = vweird.f32 %v259
    %vm267 = vweird.f32 %v260
    %vm268 = vmor %vm266, %vm267
    %v269 = vsel %vm268, %v260, %v265
    %v270 = vmul.f32 %v258, %v269
    %v271 = vld [vmem:[#allocation2 + $0x2a0] sm:$0x1]
    %v272 = vmul.f32 %v270, %v271
    %v273 = vld [vmem:[#allocation2 + $0x2a8] sm:$0x1]
    %v274 = vadd.f32 %v272, %v273
    %v275 = vld [vmem:[#allocation2 + $0x2b0] sm:$0xff]
    %v276 = vld [vmem:[#allocation2 + $0x2b8] sm:$0xff]
    %v277 = vld [vmem:[#allocation2 + $0x2c0] sm:$0xff]
    %v278 = vld [vmem:[#allocation2 + $0x2c8] sm:$0xff]
    %v279 = vld [vmem:[#allocation2 + $0x2d0] sm:$0xff]
    %v280 = vld [vmem:[#allocation2 + $0x2d8] sm:$0xff]
    %v281 = vld [vmem:[#allocation2 + $0x2e0] sm:$0xff]
    %v282 = vld [vmem:[#allocation2 + $0x2e8] sm:$0xff]
    %v283 = vld [vmem:[#allocation2 + $0x2f0] sm:$0xff]
    %v284 = vld [vmem:[#allocation2 + $0x2f8] sm:$0xff]
    %v285 = vld [vmem:[#allocation2 + $0x300] sm:$0xff]
    %v286 = vld [vmem:[#allocation2 + $0x308] sm:$0xff]
    %v287 = vld [vmem:[#allocation2 + $0x310] sm:$0xff]
    %v288 = vld [vmem:[#allocation2 + $0x318] sm:$0xff]
    %v289 = vld [vmem:[#allocation2 + $0x320] sm:$0xff]
    %v290 = vld [vmem:[#allocation2 + $0x328] sm:$0xff]
    %v291 = vld [vmem:[#allocation2 + $0x430] sm:$0x1]
    %292 = vmatpush.msra.mxu0 %v290
    %293 = vmatpush.msra.mxu0 %v289
    %294 = vmatpush.msra.mxu0 %v288
    %295 = vmatpush.msra.mxu0 %v287
    %296 = vmatpush.msra.mxu0 %v286
    %297 = vmatpush.msra.mxu0 %v285
    %298 = vmatpush.msra.mxu0 %v284
    %299 = vmatpush.msra.mxu0 %v283
    %300 = vmatpush.msra.mxu0 %v282
    %301 = vmatpush.msra.mxu0 %v281
    %302 = vmatpush.msra.mxu0 %v280
    %303 = vmatpush.msra.mxu0 %v279
    %304 = vmatpush.msra.mxu0 %v278
    %305 = vmatpush.msra.mxu0 %v277
    %306 = vmatpush.msra.mxu0 %v276
    %307 = vmatpush.msra.mxu0 %v275
    %308 = vmatmul.f32.gmra.mxu0 %v274
    %v309 = vpop.f32.mrf.mxu0
    %v310 = vadd.f32 %v291, %v309
    %311 = vdwg.mxu0
    %v312 = vsel %vm139, %v310, 0.0
    %313 = vadd.xlane.f32.xlu0 %v312
    %v314 = vpop.xlane.xlu0 %313
    %v315 = vmul.f32 %v310, %v310
    %v316 = vsel %vm139, %v315, 0.0
    %317 = vadd.xlane.f32.xlu0 %v316
    %v318 = vpop.xlane.xlu0 %317
    %v319 = vmul.f32 %v314, 0.015625
    %v320 = vmul.f32 %v318, 0.015625
    %v321 = vmul.f32 %v319, %v319
    %v322 = vsub.f32 %v320, %v321
    %v323 = vmax.f32 %v322, 0.0
    %v324 = vsub.f32 %v310, %v319
    %v325 = vadd.f32 %v323, 1e-05
    %v326 = vrsqrt.pop %v325
    %v327 = vmul.f32 %v326, %v325
    %v328 = vmul.f32 %v327, %v326
    %v329 = vmul.f32 0.5, %v328
    %v330 = vsub.f32 1.5, %v329
    %v331 = vmul.f32 %v326, %v330
    %vm332 = vweird.f32 %v325
    %vm333 = vweird.f32 %v326
    %vm334 = vmor %vm332, %vm333
    %v335 = vsel %vm334, %v326, %v331
    %v336 = vmul.f32 %v324, %v335
    %v337 = vld [vmem:[#allocation2 + $0x438] sm:$0x1]
    %v338 = vmul.f32 %v336, %v337
    %v339 = vld [vmem:[#allocation2 + $0x440] sm:$0x1]
    %v340 = vadd.f32 %v338, %v339
    %v341 = vld [vmem:[#allocation2 + $0x330] sm:$0xff]
    %v342 = vld [vmem:[#allocation2 + $0x338] sm:$0xff]
    %v343 = vld [vmem:[#allocation2 + $0x340] sm:$0xff]
    %v344 = vld [vmem:[#allocation2 + $0x348] sm:$0xff]
    %v345 = vld [vmem:[#allocation2 + $0x350] sm:$0xff]
    %v346 = vld [vmem:[#allocation2 + $0x358] sm:$0xff]
    %v347 = vld [vmem:[#allocation2 + $0x360] sm:$0xff]
    %v348 = vld [vmem:[#allocation2 + $0x368] sm:$0xff]
    %v349 = vld [vmem:[#allocation2 + $0x370] sm:$0xff]
    %v350 = vld [vmem:[#allocation2 + $0x378] sm:$0xff]
    %v351 = vld [vmem:[#allocation2 + $0x380] sm:$0xff]
    %v352 = vld [vmem:[#allocation2 + $0x388] sm:$0xff]
    %v353 = vld [vmem:[#allocation2 + $0x390] sm:$0xff]
    %v354 = vld [vmem:[#allocation2 + $0x398] sm:$0xff]
    %v355 = vld [vmem:[#allocation2 + $0x3a0] sm:$0xff]
    %v356 = vld [vmem:[#allocation2 + $0x3a8] sm:$0xff]
    %357 = vmatpush.msra.mxu0 %v356
    %358 = vmatpush.msra.mxu0 %v355
    %359 = vmatpush.msra.mxu0 %v354
    %360 = vmatpush.msra.mxu0 %v353
    %361 = vmatpush.msra.mxu0 %v352
    %362 = vmatpush.msra.mxu0 %v351
    %363 = vmatpush.msra.mxu0 %v350
    %364 = vmatpush.msra.mxu0 %v349
    %365 = vmatpush.msra.mxu0 %v348
    %366 = vmatpush.msra.mxu0 %v347
    %367 = vmatpush.msra.mxu0 %v346
    %368 = vmatpush.msra.mxu0 %v345
    %369 = vmatpush.msra.mxu0 %v344
    %370 = vmatpush.msra.mxu0 %v343
    %371 = vmatpush.msra.mxu0 %v342
    %372 = vmatpush.msra.mxu0 %v341
    %373 = vmatmul.f32.gmra.mxu0 %v340
    %v374 = vpop.f32.mrf.mxu0
    %v375 = vadd.f32 0.0, %v374
    %376 = vdwg.mxu0
    %v377 = vadd.f32 %v100, %v375
    %v378 = vmax.f32 %v377, 0.0
    %v379 = vld [vmem:[#allocation2 + $0x3b0] sm:$0xff]
    %v380 = vld [vmem:[#allocation2 + $0x3b8] sm:$0xff]
    %v381 = vld [vmem:[#allocation2 + $0x3c0] sm:$0xff]
    %v382 = vld [vmem:[#allocation2 + $0x3c8] sm:$0xff]
    %v383 = vld [vmem:[#allocation2 + $0x3d0] sm:$0xff]
    %v384 = vld [vmem:[#allocation2 + $0x3d8] sm:$0xff]
    %v385 = vld [vmem:[#allocation2 + $0x3e0] sm:$0xff]
    %v386 = vld [vmem:[#allocation2 + $0x3e8] sm:$0xff]
    %v387 = vld [vmem:[#allocation2 + $0x3f0] sm:$0xff]
    %v388 = vld [vmem:[#allocation2 + $0x3f8] sm:$0xff]
    %v389 = vld [vmem:[#allocation2 + $0x400] sm:$0xff]
    %v390 = vld [vmem:[#allocation2 + $0x408] sm:$0xff]
    %v391 = vld [vmem:[#allocation2 + $0x410] sm:$0xff]
    %v392 = vld [vmem:[#allocation2 + $0x418] sm:$0xff]
    %v393 = vld [vmem:[#allocation2 + $0x420] sm:$0xff]
    %v394 = vld [vmem:[#allocation2 + $0x428] sm:$0xff]
    %v395 = vld [vmem:[#allocation2 + $0x448] sm:$0x1]
    %396 = vmatpush.msra.mxu0 %v394
    %397 = vmatpush.msra.mxu0 %v393
    %398 = vmatpush.msra.mxu0 %v392
    %399 = vmatpush.msra.mxu0 %v391
    %400 = vmatpush.msra.mxu0 %v390
    %401 = vmatpush.msra.mxu0 %v389
    %402 = vmatpush.msra.mxu0 %v388
    %403 = vmatpush.msra.mxu0 %v387
    %404 = vmatpush.msra.mxu0 %v386
    %405 = vmatpush.msra.mxu0 %v385
    %406 = vmatpush.msra.mxu0 %v384
    %407 = vmatpush.msra.mxu0 %v383
    %408 = vmatpush.msra.mxu0 %v382
    %409 = vmatpush.msra.mxu0 %v381
    %410 = vmatpush.msra.mxu0 %v380
    %411 = vmatpush.msra.mxu0 %v379
    %412 = vmatmul.f32.gmra.mxu0 %v378
    %v413 = vpop.f32.mrf.mxu0
    %v414 = vadd.f32 %v395, %v413
    %415 = vdwg.mxu0
    %v416 = vmax.f32 %v414, 0.0
    %v417 = vadd.f32 %v340, %v416
    %v418 = vsel %vm139, %v417, 0.0
    %419 = vadd.xlane.f32.xlu0 %v418
    %v420 = vpop.xlane.xlu0 %419
    %v421 = vmul.f32 %v417, %v417
    %v422 = vsel %vm139, %v421, 0.0
    %423 = vadd.xlane.f32.xlu0 %v422
    %v424 = vpop.xlane.xlu0 %423
    %v425 = vmul.f32 %v420, 0.015625
    %v426 = vmul.f32 %v424, 0.015625
    %v427 = vmul.f32 %v425, %v425
    %v428 = vsub.f32 %v426, %v427
    %v429 = vmax.f32 %v428, 0.0
    %v430 = vsub.f32 %v417, %v425
    %v431 = vadd.f32 %v429, 1e-05
    %v432 = vrsqrt.pop %v431
    %v433 = vmul.f32 %v432, %v431
    %v434 = vmul.f32 %v433, %v432
    %v435 = vmul.f32 0.5, %v434
    %v436 = vsub.f32 1.5, %v435
    %v437 = vmul.f32 %v432, %v436
    %vm438 = vweird.f32 %v431
    %vm439 = vweird.f32 %v432
    %vm440 = vmor %vm438, %vm439
    %v441 = vsel %vm440, %v432, %v437
    %v442 = vmul.f32 %v430, %v441
    %v443 = vld [vmem:[#allocation2 + $0x450] sm:$0x1]
    %v444 = vmul.f32 %v442, %v443
    %v445 = vld [vmem:[#allocation2 + $0x458] sm:$0x1]
    %v446 = vadd.f32 %v444, %v445
    %v447 = vld [vmem:[#allocation2 + $0x460] sm:$0xff]
    %v448 = vld [vmem:[#allocation2 + $0x468] sm:$0xff]
    %v449 = vld [vmem:[#allocation2 + $0x470] sm:$0xff]
    %v450 = vld [vmem:[#allocation2 + $0x478] sm:$0xff]
    %v451 = vld [vmem:[#allocation2 + $0x480] sm:$0xff]
    %v452 = vld [vmem:[#allocation2 + $0x488] sm:$0xff]
    %v453 = vld [vmem:[#allocation2 + $0x490] sm:$0xff]
    %v454 = vld [vmem:[#allocation2 + $0x498] sm:$0xff]
    %v455 = vld [vmem:[#allocation2 + $0x4a0] sm:$0xff]
    %v456 = vld [vmem:[#allocation2 + $0x4a8] sm:$0xff]
    %v457 = vld [vmem:[#allocation2 + $0x4b0] sm:$0xff]
    %v458 = vld [vmem:[#allocation2 + $0x4b8] sm:$0xff]
    %v459 = vld [vmem:[#allocation2 + $0x4c0] sm:$0xff]
    %v460 = vld [vmem:[#allocation2 + $0x4c8] sm:$0xff]
    %v461 = vld [vmem:[#allocation2 + $0x4d0] sm:$0xff]
    %v462 = vld [vmem:[#allocation2 + $0x4d8] sm:$0xff]
    %v463 = vld [vmem:[#allocation2 + $0x5e0] sm:$0x1]
    %464 = vmatpush.msra.mxu0 %v462
    %465 = vmatpush.msra.mxu0 %v461
    %466 = vmatpush.msra.mxu0 %v460
    %467 = vmatpush.msra.mxu0 %v459
    %468 = vmatpush.msra.mxu0 %v458
    %469 = vmatpush.msra.mxu0 %v457
    %470 = vmatpush.msra.mxu0 %v456
    %471 = vmatpush.msra.mxu0 %v455
    %472 = vmatpush.msra.mxu0 %v454
    %473 = vmatpush.msra.mxu0 %v453
    %474 = vmatpush.msra.mxu0 %v452
    %475 = vmatpush.msra.mxu0 %v451
    %476 = vmatpush.msra.mxu0 %v450
    %477 = vmatpush.msra.mxu0 %v449
    %478 = vmatpush.msra.mxu0 %v448
    %479 = vmatpush.msra.mxu0 %v447
    %480 = vmatmul.f32.gmra.mxu0 %v446
    %v481 = vpop.f32.mrf.mxu0
    %v482 = vadd.f32 %v463, %v481
    %483 = vdwg.mxu0
    %v484 = vsel %vm139, %v482, 0.0
    %485 = vadd.xlane.f32.xlu0 %v484
    %v486 = vpop.xlane.xlu0 %485
    %v487 = vmul.f32 %v482, %v482
    %v488 = vsel %vm139, %v487, 0.0
    %489 = vadd.xlane.f32.xlu0 %v488
    %v490 = vpop.xlane.xlu0 %489
    %v491 = vmul.f32 %v486, 0.015625
    %v492 = vmul.f32 %v490, 0.015625
    %v493 = vmul.f32 %v491, %v491
    %v494 = vsub.f32 %v492, %v493
    %v495 = vmax.f32 %v494, 0.0
    %v496 = vsub.f32 %v482, %v491
    %v497 = vadd.f32 %v495, 1e-05
    %v498 = vrsqrt.pop %v497
    %v499 = vmul.f32 %v498, %v497
    %v500 = vmul.f32 %v499, %v498
    %v501 = vmul.f32 0.5, %v500
    %v502 = vsub.f32 1.5, %v501
    %v503 = vmul.f32 %v498, %v502
    %vm504 = vweird.f32 %v497
    %vm505 = vweird.f32 %v498
    %vm506 = vmor %vm504, %vm505
    %v507 = vsel %vm506, %v498, %v503
    %v508 = vmul.f32 %v496, %v507
    %v509 = vld [vmem:[#allocation2 + $0x5e8] sm:$0x1]
    %v510 = vmul.f32 %v508, %v509
    %v511 = vld [vmem:[#allocation2 + $0x5f0] sm:$0x1]
    %v512 = vadd.f32 %v510, %v511
    %v513 = vld [vmem:[#allocation2 + $0x4e0] sm:$0xff]
    %v514 = vld [vmem:[#allocation2 + $0x4e8] sm:$0xff]
    %v515 = vld [vmem:[#allocation2 + $0x4f0] sm:$0xff]
    %v516 = vld [vmem:[#allocation2 + $0x4f8] sm:$0xff]
    %v517 = vld [vmem:[#allocation2 + $0x500] sm:$0xff]
    %v518 = vld [vmem:[#allocation2 + $0x508] sm:$0xff]
    %v519 = vld [vmem:[#allocation2 + $0x510] sm:$0xff]
    %v520 = vld [vmem:[#allocation2 + $0x518] sm:$0xff]
    %v521 = vld [vmem:[#allocation2 + $0x520] sm:$0xff]
    %v522 = vld [vmem:[#allocation2 + $0x528] sm:$0xff]
    %v523 = vld [vmem:[#allocation2 + $0x530] sm:$0xff]
    %v524 = vld [vmem:[#allocation2 + $0x538] sm:$0xff]
    %v525 = vld [vmem:[#allocation2 + $0x540] sm:$0xff]
    %v526 = vld [vmem:[#allocation2 + $0x548] sm:$0xff]
    %v527 = vld [vmem:[#allocation2 + $0x550] sm:$0xff]
    %v528 = vld [vmem:[#allocation2 + $0x558] sm:$0xff]
    %529 = vmatpush.msra.mxu0 %v528
    %530 = vmatpush.msra.mxu0 %v527
    %531 = vmatpush.msra.mxu0 %v526
    %532 = vmatpush.msra.mxu0 %v525
    %533 = vmatpush.msra.mxu0 %v524
    %534 = vmatpush.msra.mxu0 %v523
    %535 = vmatpush.msra.mxu0 %v522
    %536 = vmatpush.msra.mxu0 %v521
    %537 = vmatpush.msra.mxu0 %v520
    %538 = vmatpush.msra.mxu0 %v519
    %539 = vmatpush.msra.mxu0 %v518
    %540 = vmatpush.msra.mxu0 %v517
    %541 = vmatpush.msra.mxu0 %v516
    %542 = vmatpush.msra.mxu0 %v515
    %543 = vmatpush.msra.mxu0 %v514
    %544 = vmatpush.msra.mxu0 %v513
    %545 = vmatmul.f32.gmra.mxu0 %v512
    %v546 = vpop.f32.mrf.mxu0
    %v547 = vadd.f32 0.0, %v546
    %548 = vdwg.mxu0
    %v549 = vadd.f32 %v100, %v547
    %v550 = vmax.f32 %v549, 0.0
    %v551 = vld [vmem:[#allocation2 + $0x560] sm:$0xff]
    %v552 = vld [vmem:[#allocation2 + $0x568] sm:$0xff]
    %v553 = vld [vmem:[#allocation2 + $0x570] sm:$0xff]
    %v554 = vld [vmem:[#allocation2 + $0x578] sm:$0xff]
    %v555 = vld [vmem:[#allocation2 + $0x580] sm:$0xff]
    %v556 = vld [vmem:[#allocation2 + $0x588] sm:$0xff]
    %v557 = vld [vmem:[#allocation2 + $0x590] sm:$0xff]
    %v558 = vld [vmem:[#allocation2 + $0x598] sm:$0xff]
    %v559 = vld [vmem:[#allocation2 + $0x5a0] sm:$0xff]
    %v560 = vld [vmem:[#allocation2 + $0x5a8] sm:$0xff]
    %v561 = vld [vmem:[#allocation2 + $0x5b0] sm:$0xff]
    %v562 = vld [vmem:[#allocation2 + $0x5b8] sm:$0xff]
    %v563 = vld [vmem:[#allocation2 + $0x5c0] sm:$0xff]
    %v564 = vld [vmem:[#allocation2 + $0x5c8] sm:$0xff]
    %v565 = vld [vmem:[#allocation2 + $0x5d0] sm:$0xff]
    %v566 = vld [vmem:[#allocation2 + $0x5d8] sm:$0xff]
    %v567 = vld [vmem:[#allocation2 + $0x5f8] sm:$0x1]
    %568 = vmatpush.msra.mxu0 %v566
    %569 = vmatpush.msra.mxu0 %v565
    %570 = vmatpush.msra.mxu0 %v564
    %571 = vmatpush.msra.mxu0 %v563
    %572 = vmatpush.msra.mxu0 %v562
    %573 = vmatpush.msra.mxu0 %v561
    %574 = vmatpush.msra.mxu0 %v560
    %575 = vmatpush.msra.mxu0 %v559
    %576 = vmatpush.msra.mxu0 %v558
    %577 = vmatpush.msra.mxu0 %v557
    %578 = vmatpush.msra.mxu0 %v556
    %579 = vmatpush.msra.mxu0 %v555
    %580 = vmatpush.msra.mxu0 %v554
    %581 = vmatpush.msra.mxu0 %v553
    %582 = vmatpush.msra.mxu0 %v552
    %583 = vmatpush.msra.mxu0 %v551
    %584 = vmatmul.f32.gmra.mxu0 %v550
    %v585 = vpop.f32.mrf.mxu0
    %v586 = vadd.f32 %v567, %v585
    %587 = vdwg.mxu0
    %v588 = vmax.f32 %v586, 0.0
    %v589 = vadd.f32 %v512, %v588
    %v590 = vsel %vm139, %v589, 0.0
    %591 = vadd.xlane.f32.xlu0 %v590
    %v592 = vpop.xlane.xlu0 %591
    %v593 = vmul.f32 %v589, %v589
    %v594 = vsel %vm139, %v593, 0.0
    %595 = vadd.xlane.f32.xlu0 %v594
    %v596 = vpop.xlane.xlu0 %595
    %v597 = vmul.f32 %v592, 0.015625
    %v598 = vmul.f32 %v596, 0.015625
    %v599 = vmul.f32 %v597, %v597
    %v600 = vsub.f32 %v598, %v599
    %v601 = vmax.f32 %v600, 0.0
    %v602 = vsub.f32 %v589, %v597
    %v603 = vadd.f32 %v601, 1e-05
    %v604 = vrsqrt.pop %v603
    %v605 = vmul.f32 %v604, %v603
    %v606 = vmul.f32 %v605, %v604
    %v607 = vmul.f32 0.5, %v606
    %v608 = vsub.f32 1.5, %v607
    %v609 = vmul.f32 %v604, %v608
    %vm610 = vweird.f32 %v603
    %vm611 = vweird.f32 %v604
    %vm612 = vmor %vm610, %vm611
    %v613 = vsel %vm612, %v604, %v609
    %v614 = vmul.f32 %v602, %v613
    %v615 = vld [vmem:[#allocation2 + $0x600] sm:$0x1]
    %v616 = vmul.f32 %v614, %v615
    %v617 = vld [vmem:[#allocation2 + $0x608] sm:$0x1]
    %v618 = vadd.f32 %v616, %v617
    %v619 = vld [vmem:[#allocation2 + $0x610] sm:$0xff]
    %v620 = vld [vmem:[#allocation2 + $0x618] sm:$0xff]
    %v621 = vld [vmem:[#allocation2 + $0x620] sm:$0xff]
    %v622 = vld [vmem:[#allocation2 + $0x628] sm:$0xff]
    %v623 = vld [vmem:[#allocation2 + $0x630] sm:$0xff]
    %v624 = vld [vmem:[#allocation2 + $0x638] sm:$0xff]
    %v625 = vld [vmem:[#allocation2 + $0x640] sm:$0xff]
    %v626 = vld [vmem:[#allocation2 + $0x648] sm:$0xff]
    %v627 = vld [vmem:[#allocation2 + $0x650] sm:$0xff]
    %v628 = vld [vmem:[#allocation2 + $0x658] sm:$0xff]
    %v629 = vld [vmem:[#allocation2 + $0x660] sm:$0xff]
    %v630 = vld [vmem:[#allocation2 + $0x668] sm:$0xff]
    %v631 = vld [vmem:[#allocation2 + $0x670] sm:$0xff]
    %v632 = vld [vmem:[#allocation2 + $0x678] sm:$0xff]
    %v633 = vld [vmem:[#allocation2 + $0x680] sm:$0xff]
    %v634 = vld [vmem:[#allocation2 + $0x688] sm:$0xff]
    %v635 = vld [vmem:[#allocation2 + $0x710] sm:$0x1]
    %636 = vmatpush.msra.mxu0 %v634
    %637 = vmatpush.msra.mxu0 %v633
    %638 = vmatpush.msra.mxu0 %v632
    %639 = vmatpush.msra.mxu0 %v631
    %640 = vmatpush.msra.mxu0 %v630
    %641 = vmatpush.msra.mxu0 %v629
    %642 = vmatpush.msra.mxu0 %v628
    %643 = vmatpush.msra.mxu0 %v627
    %644 = vmatpush.msra.mxu0 %v626
    %645 = vmatpush.msra.mxu0 %v625
    %646 = vmatpush.msra.mxu0 %v624
    %647 = vmatpush.msra.mxu0 %v623
    %648 = vmatpush.msra.mxu0 %v622
    %649 = vmatpush.msra.mxu0 %v621
    %650 = vmatpush.msra.mxu0 %v620
    %651 = vmatpush.msra.mxu0 %v619
    %652 = vmatmul.f32.gmra.mxu0 %v618
    %v653 = vpop.f32.mrf.mxu0
    %v654 = vadd.f32 %v635, %v653
    %655 = vdwg.mxu0
    %v656 = vmax.f32 %v654, 0.0
    %v657 = vld [vmem:[#allocation2 + $0x690] sm:$0xff]
    %v658 = vld [vmem:[#allocation2 + $0x698] sm:$0xff]
    %v659 = vld [vmem:[#allocation2 + $0x6a0] sm:$0xff]
    %v660 = vld [vmem:[#allocation2 + $0x6a8] sm:$0xff]
    %v661 = vld [vmem:[#allocation2 + $0x6b0] sm:$0xff]
    %v662 = vld [vmem:[#allocation2 + $0x6b8] sm:$0xff]
    %v663 = vld [vmem:[#allocation2 + $0x6c0] sm:$0xff]
    %v664 = vld [vmem:[#allocation2 + $0x6c8] sm:$0xff]
    %v665 = vld [vmem:[#allocation2 + $0x6d0] sm:$0xff]
    %v666 = vld [vmem:[#allocation2 + $0x6d8] sm:$0xff]
    %v667 = vld [vmem:[#allocation2 + $0x6e0] sm:$0xff]
    %v668 = vld [vmem:[#allocation2 + $0x6e8] sm:$0xff]
    %v669 = vld [vmem:[#allocation2 + $0x6f0] sm:$0xff]
    %v670 = vld [vmem:[#allocation2 + $0x6f8] sm:$0xff]
    %v671 = vld [vmem:[#allocation2 + $0x700] sm:$0xff]
    %v672 = vld [vmem:[#allocation2 + $0x708] sm:$0xff]
    %v673 = vld [vmem:[#allocation2 + $0x718] sm:$0x1]
    %674 = vmatpush.msra.mxu0 %v672
    %675 = vmatpush.msra.mxu0 %v671
    %676 = vmatpush.msra.mxu0 %v670
    %677 = vmatpush.msra.mxu0 %v669
    %678 = vmatpush.msra.mxu0 %v668
    %679 = vmatpush.msra.mxu0 %v667
    %680 = vmatpush.msra.mxu0 %v666
    %681 = vmatpush.msra.mxu0 %v665
    %682 = vmatpush.msra.mxu0 %v664
    %683 = vmatpush.msra.mxu0 %v663
    %684 = vmatpush.msra.mxu0 %v662
    %685 = vmatpush.msra.mxu0 %v661
    %686 = vmatpush.msra.mxu0 %v660
    %687 = vmatpush.msra.mxu0 %v659
    %688 = vmatpush.msra.mxu0 %v658
    %689 = vmatpush.msra.mxu0 %v657
    %690 = vmatmul.f32.gmra.mxu0 %v656
    %v691 = vpop.f32.mrf.mxu0
    %v692 = vadd.f32 %v673, %v691
    %693 = vdwg.mxu0
    %v694 = vmax.f32 %v692, 0.0
    %v695 = vld [vmem:[#allocation2 + $0x720] sm:$0x1]
    %v696 = vsel %vm139, %v694, -inf
    %697 = vmax.xlane.f32.xlu0 %v696
    %v698 = vpop.xlane.xlu0 %697
    %v699 = vsub.f32 %v694, %v698
    %v700 = vmul.f32 %v699, 1.442695
    %v701 = vpow.pop %v700
    %v702 = vmul.f32 %v701, %v695
    %v703 = vsel %vm139, %v702, 0.0
    %704 = vadd.xlane.f32.xlu0 %v703
    %v705 = vpop.xlane.xlu0 %704
    %v706 = vrcp.pop %v705
    %v707 = vmul.f32 %v705, %v706
    %v708 = vsub.f32 1.0, %v707
    %v709 = vmul.f32 %v706, %v708
    %v710 = vadd.f32 %v706, %v709
    %vm711 = vweird.f32 %v705
    %vm712 = vweird.f32 %v706
    %vm713 = vmor %vm711, %vm712
    %v714 = vsel %vm713, %v706, %v710
    %v715 = vand.u32 2147483647, %v705
    %vm716 = vcmp.eq.f32.partialorder %v715, 8.507059e+37
    %v717 = vand.u32 %v705, 2147483648
    %v718 = vor.u32 1.1754944e-38, %v717
    %v719 = vsel %vm716, %v718, %v714
    %v720 = vmul.f32 %v702, %v719
    %721 = vst [vmem:[%s2] sm:$0x1] %v720
    // Predicated region
    $region14: #{network_forward.1} parent=1 // pred_check
      _
    $region15: #{network_forward.1} parent=1 // pred_check_branch
      %723 = sbr.rel (0) target = $region17
    $region16: #{network_forward.1} parent=1 // pred_region
      _
    $region17: #{network_forward.1} parent=1 // pred_fallthru
      _
    // Predicated region
    $region18: #{network_forward.1} parent=1 // pred_check
      _
    $region19: #{network_forward.1} parent=1 // pred_check_branch
      %725 = sbr.rel (0) target = $region21
    $region20: #{network_forward.1} parent=1 // pred_region
      _
    $region21: #{network_forward.1} parent=1 // pred_fallthru
      _
    %726 = vsyncpa [#allocation3], 1

</llo_original>
